<compile_context>
chip_gen: v5e
topology: v5e:2x2
jax: 0.10.0
libtpu: 0.0.40
codegen_flags: <defaults>
</compile_context>

<pallas_src>
import functools
import math

import jax
import jax.numpy as jnp
from jax.experimental import pallas as pl
from jax.experimental.pallas import tpu as pltpu


def _layernorm_kernel(alpha_ref, bias_ref, x_ref, o_ref, *, eps, hidden):
    x = x_ref[...].astype(jnp.float32)                    # (block_rows, hidden)
    mean = jnp.mean(x, axis=-1, keepdims=True)             # XLU reduce
    xc = x - mean
    # Unbiased variance (torch.std default divides by N-1), numerically-stable
    # two-pass form.
    var = jnp.sum(xc * xc, axis=-1, keepdims=True) * (1.0 / (hidden - 1))
    std = jnp.sqrt(var)
    # Reciprocal only on the small (rows, 1) column; fold alpha into it so the
    # full-tile work is a single fused multiply-add.  approx=False keeps the
    # result within 1e-5 of the fp32 reference.
    scale = alpha_ref[0] * pl.reciprocal(std + eps, approx=False)
    o_ref[...] = (xc * scale + bias_ref[0]).astype(o_ref.dtype)


def _pick_block_rows(rows, hidden, itemsize):
    """Largest sublane-aligned row tile fitting a conservative VMEM budget.

    Budget model per row: 2x double-buffered input + 2x double-buffered output
    tiles in the input dtype plus ~2 fp32 intermediates
    -> hidden * (4*itemsize + 8) bytes.  A ~32 MiB working set leaves headroom
    on all of v5e / v6e (128 MiB VMEM) and v7x (64 MiB VMEM).
    """
    budget = 32 * 1024 * 1024
    bytes_per_row = max(1, hidden * (4 * itemsize + 8))
    br = budget // bytes_per_row
    br = min(br, 1024)
    # Never larger than the (sublane-rounded) problem itself.
    br = min(br, -(-rows // 8) * 8)
    if br >= 16:
        br -= br % 16   # multiple of 16: fine for fp32, packing-friendly for bf16
    else:
        br = 8
    return max(8, br)


def layer_norm(x, alpha, bias, eps=1e-6, block_rows=None):
    """alpha, bias: shape (1,) scalar parameters (as in the PyTorch module)."""
    orig_shape = x.shape
    hidden = orig_shape[-1]
    rows = math.prod(orig_shape[:-1]) if len(orig_shape) > 1 else 1
    x2 = x.reshape(rows, hidden)

    itemsize = jnp.dtype(x.dtype).itemsize
    if block_rows is None:
        block_rows = _pick_block_rows(rows, hidden, itemsize)

    grid = (pl.cdiv(rows, block_rows),)

    # Note: for best store bandwidth `hidden` should be a multiple of 128
    # (lane-dense stores).  For small hidden (e.g. the demo's 32) the block
    # still covers the full hidden dim -- correct, just masked stores.
    kernel = functools.partial(_layernorm_kernel, eps=eps, hidden=hidden)

    out = pl.pallas_call(
        kernel,
        out_shape=jax.ShapeDtypeStruct((rows, hidden), x.dtype),
        grid_spec=pltpu.PrefetchScalarGridSpec(
            num_scalar_prefetch=0,
            grid=grid,
            in_specs=[
                pl.BlockSpec(memory_space=pltpu.SMEM),             # alpha (1,)
                pl.BlockSpec(memory_space=pltpu.SMEM),             # bias  (1,)
                pl.BlockSpec((block_rows, hidden), lambda i: (i, 0)),
            ],
            out_specs=pl.BlockSpec((block_rows, hidden), lambda i: (i, 0)),
        ),
        compiler_params=pltpu.CompilerParams(
            dimension_semantics=("parallel",),   # megacore-shard rows on v7x
            vmem_limit_bytes=48 * 1024 * 1024,
        ),
        cost_estimate=pl.CostEstimate(
            flops=7 * rows * hidden,
            transcendentals=2 * rows,
            bytes_accessed=2 * rows * hidden * itemsize,
        ),
    )(alpha, bias, x2)

    return out.reshape(orig_shape)


if __name__ == "__main__":
    key = jax.random.PRNGKey(0)
    batch, seq, hidden = 2, 8, 32
    x = jax.random.normal(key, (batch, seq, hidden), dtype=jnp.float32)

    # Deterministic parameter init matching nn.Parameter(torch.ones(1)/zeros(1))
    alpha = jnp.ones((1,), dtype=jnp.float32)
    bias = jnp.zeros((1,), dtype=jnp.float32)
    eps = 1e-6

    out = layer_norm(x, alpha, bias, eps=eps)
    out = jax.block_until_ready(out)

    # Reference (pure JAX, unbiased std like torch.std, eps added to the std)
    mean = jnp.mean(x, axis=-1, keepdims=True)
    std = jnp.sqrt(jnp.sum((x - mean) ** 2, axis=-1, keepdims=True) / (hidden - 1))
    ref = alpha[0] * (x - mean) / (std + eps) + bias[0]
    assert jnp.allclose(out, ref, atol=1e-5, rtol=1e-5), "mismatch vs reference"

    print("KERNEL_OK")
</pallas_src>

<mosaic_0001>
module attributes {stable_mosaic.version = 11 : i64} {
  func.func @_layernorm_kernel(%arg0: i32, %arg1: memref<1xf32, #tpu.memory_space<smem>>, %arg2: memref<1xf32, #tpu.memory_space<smem>>, %arg3: memref<16x32xf32, #tpu.memory_space<vmem>>, %arg4: memref<16x32xf32, #tpu.memory_space<vmem>>) attributes {dimension_semantics = [#tpu.dimension_semantics<parallel>], iteration_bounds = array<i64: 1>, scalar_prefetch = 0 : i64, scratch_operands = 0 : i64, tpu.core_type = #tpu.core_type<tc>, window_params = [{transform_indices = @transform_0, window_bounds = array<i64: 1>}, {transform_indices = @transform_1, window_bounds = array<i64: 1>}, {transform_indices = @transform_2, window_bounds = array<i64: 16, 32>}, {transform_indices = @transform_3, window_bounds = array<i64: 16, 32>}]} {
    %c0 = arith.constant 0 : index
    %c0_0 = arith.constant 0 : index
    %0 = vector.load %arg3[%c0, %c0_0] : memref<16x32xf32, #tpu.memory_space<vmem>>, vector<16x32xf32>
    %cst = arith.constant dense<0.000000e+00> : vector<16xf32>
    %1 = vector.multi_reduction <add>, %0, %cst [1] : vector<16x32xf32> to vector<16xf32>
    %2 = vector.shape_cast %1 : vector<16xf32> to vector<16x1xf32>
    %cst_1 = arith.constant 3.200000e+01 : f32
    %3 = vector.broadcast %cst_1 : f32 to vector<16x1xf32>
    %4 = arith.divf %2, %3 : vector<16x1xf32>
    %5 = vector.broadcast %4 : vector<16x1xf32> to vector<16x32xf32>
    %6 = arith.subf %0, %5 : vector<16x32xf32>
    %7 = arith.mulf %6, %6 : vector<16x32xf32>
    %cst_2 = arith.constant dense<0.000000e+00> : vector<16xf32>
    %8 = vector.multi_reduction <add>, %7, %cst_2 [1] : vector<16x32xf32> to vector<16xf32>
    %9 = vector.shape_cast %8 : vector<16xf32> to vector<16x1xf32>
    %cst_3 = arith.constant 0.0322580636 : f32
    %10 = vector.broadcast %cst_3 : f32 to vector<16x1xf32>
    %11 = arith.mulf %9, %10 : vector<16x1xf32>
    %12 = math.sqrt %11 : vector<16x1xf32>
    %c0_4 = arith.constant 0 : index
    %13 = memref.load %arg1[%c0_4] : memref<1xf32, #tpu.memory_space<smem>>
    %cst_5 = arith.constant 9.99999997E-7 : f32
    %14 = vector.broadcast %cst_5 : f32 to vector<16x1xf32>
    %15 = arith.addf %12, %14 : vector<16x1xf32>
    %16 = tpu.reciprocal %15 : vector<16x1xf32> -> vector<16x1xf32>
    %17 = vector.broadcast %13 : f32 to vector<16x1xf32>
    %18 = arith.mulf %17, %16 : vector<16x1xf32>
    %19 = vector.broadcast %18 : vector<16x1xf32> to vector<16x32xf32>
    %20 = arith.mulf %6, %19 : vector<16x32xf32>
    %c0_6 = arith.constant 0 : index
    %21 = memref.load %arg2[%c0_6] : memref<1xf32, #tpu.memory_space<smem>>
    %22 = vector.broadcast %21 : f32 to vector<16x32xf32>
    %23 = arith.addf %20, %22 : vector<16x32xf32>
    %c0_7 = arith.constant 0 : index
    %c0_8 = arith.constant 0 : index
    %24 = vector.load %arg4[%c0_7, %c0_8] : memref<16x32xf32, #tpu.memory_space<vmem>>, vector<16x32xf32>
    tpu.vector_store %arg4[%c0_7, %c0_8], %23 {strides = array<i32>} : memref<16x32xf32, #tpu.memory_space<vmem>>, vector<16x32xf32>,
    return
  }
  func.func @transform_0(%arg0: i32) -> i32 {
    %c0_i32 = arith.constant 0 : i32
    %c0_i32_0 = arith.constant 0 : i32
    return %c0_i32 : i32
  }
  func.func @transform_1(%arg0: i32) -> i32 {
    %c0_i32 = arith.constant 0 : i32
    %c0_i32_0 = arith.constant 0 : i32
    return %c0_i32 : i32
  }
  func.func @transform_2(%arg0: i32) -> (i32, i32) {
    %c0_i32 = arith.constant 0 : i32
    %c0_i32_0 = arith.constant 0 : i32
    return %arg0, %c0_i32 : i32, i32
  }
  func.func @transform_3(%arg0: i32) -> (i32, i32) {
    %c0_i32 = arith.constant 0 : i32
    %c0_i32_0 = arith.constant 0 : i32
    return %arg0, %c0_i32 : i32, i32
  }
}

</mosaic_0001>

<llo_original>
// kernel: tpu_custom_call.1
$region0: #{tpu_custom_call.1}
  #allocation0 [shape = 'u32[]', space=smem, size = 0x4, offset = 0x4, fixed_abs, tag = 'smem constant byte address 0x4 - core index']
  #allocation1 [shape = 'u32[72,128]{1,0:T(1,128)}', space=vmem, size = 0x9000, scoped, tag = 'internal scratch']
  #allocation2 [shape = 'f32[1]{0:T(128)S(6)}', space=smem, size = 0x200, scoped, tag = 'scoped memory for tpu_custom_call.1']
  #allocation3 [shape = 'f32[1]{0:T(128)S(6)}', space=smem, size = 0x200, scoped, tag = 'scoped memory for tpu_custom_call.1']
  %s0 = inlined_call_operand.<no memory space> [shape: f32[1], index: 0, kind: input, shape index: {}]
  %s1 = inlined_call_operand.<no memory space> [shape: f32[1], index: 1, kind: input, shape index: {}]
  %s2 = inlined_call_operand.hbm [shape: f32[16,32], index: 2, kind: input, shape index: {}]
  %s3 = inlined_call_operand.hbm [shape: f32[16,32], index: 3, kind: output, shape index: {}]
  %s4 = sld [smem:[#allocation0]]
  $region26: #{tpu_custom_call.1} parent=0
    _
  %s6 = ssub.s32 1, %s4
  %s7 = scalar_select 0, %s6, %s4
  %8 = sst [smem:[#allocation2]] %s0
  %9 = sst [smem:[#allocation3]] %s1
  $region1: #{tpu_custom_call.1} parent=0
    #allocation4 [shape = 'u8[8192]{0}', space=vmem, size = 0x2000, scoped, tag = 'input window, operand 2, single buffered']
    #allocation5 [shape = 's32[1]{0}', space=sflag, size = 0x4, scoped, tag = 'scoped memory for tpu_custom_call.1']
    #allocation6 [shape = 's32[1]{0}', space=sflag, size = 0x4, scoped, tag = 'scoped memory for tpu_custom_call.1']
    #allocation7 [shape = 'u8[8192]{0}', space=vmem, size = 0x2000, scoped, tag = 'output window, operand 0, single buffered']
    %10 = vsyncpa [#allocation5], 0
    %11 = vsyncpa [#allocation6], 0
    // Predicated region
    $region2: #{tpu_custom_call.1} parent=1 // pred_check
      _
    $region3: #{tpu_custom_call.1} parent=1 // pred_check_branch
      %13 = sbr.rel (0) target = $region5
    $region4: #{tpu_custom_call.1} parent=1 // pred_region
      _
    $region5: #{tpu_custom_call.1} parent=1 // pred_fallthru
      _
    // Predicated region
    $region6: #{tpu_custom_call.1} parent=1 // pred_check
      _
    $region7: #{tpu_custom_call.1} parent=1 // pred_check_branch
      %15 = sbr.rel (0) target = $region9
    $region8: #{tpu_custom_call.1} parent=1 // pred_region
      _
    $region9: #{tpu_custom_call.1} parent=1 // pred_fallthru
      _
    // Predicated region
    $region10: #{tpu_custom_call.1} parent=1 // pred_check
      _
    $region11: #{tpu_custom_call.1} parent=1 // pred_check_branch
      %17 = sbr.rel (0) target = $region13
    $region12: #{tpu_custom_call.1} parent=1 // pred_region
      %19 = vsyncadd [#allocation5], 0
      %s20 = sshll.u32 %s2, 4
      %s21 = int_to_ptr.hbm [resolvable:$true] %s20
      %s22 = sshll.u32 [#allocation4], 4
      %s23 = int_to_ptr.vmem [resolvable:$true] %s22
      %28 = dma.hbm_to_vmem [thread:$0]  %s21, 256, %s23, [#allocation5], 128, 128, 8
    $region13: #{tpu_custom_call.1} parent=1 // pred_fallthru
      _
    // Predicated region
    $region14: #{tpu_custom_call.1} parent=1 // pred_check
      _
    $region15: #{tpu_custom_call.1} parent=1 // pred_check_branch
      %30 = sbr.rel (0) target = $region17
    $region16: #{tpu_custom_call.1} parent=1 // pred_region
      %32 = dma.done [#allocation5], 256
    $region17: #{tpu_custom_call.1} parent=1 // pred_fallthru
      _
    %v33 = vld [vmem:[#allocation4] sm:$0xff]
    %v34 = vld [vmem:[#allocation4 + $0x8] sm:$0xff]
    %vm35 = vcmask 261120
    %v36 = vsel %vm35, %v33, 0.0
    %37 = vadd.xlane.f32.xlu0 %v36
    %v38 = vpop.xlane.xlu0 %37
    %v39 = vsel %vm35, %v34, 0.0
    %40 = vadd.xlane.f32.xlu0 %v39
    %v41 = vpop.xlane.xlu0 %40
    %v42 = vrcp.pop 32.0
    %v43 = vmul.f32 32.0, %v42
    %v44 = vsub.f32 1.0, %v43
    %v45 = vmul.f32 %v42, %v44
    %v46 = vadd.f32 %v42, %v45
    %vm47 = vweird.f32 %v42
    %v48 = vsel %vm47, %v42, %v46
    %v49 = vmul.f32 %v38, %v48
    %v50 = vmul.f32 %v41, %v48
    %v51 = vsub.f32 %v33, %v49
    %v52 = vsub.f32 %v34, %v50
    %v53 = vmul.f32 %v51, %v51
    %v54 = vmul.f32 %v52, %v52
    %v55 = vsel %vm35, %v53, 0.0
    %56 = vadd.xlane.f32.xlu0 %v55
    %v57 = vpop.xlane.xlu0 %56
    %v58 = vsel %vm35, %v54, 0.0
    %59 = vadd.xlane.f32.xlu0 %v58
    %v60 = vpop.xlane.xlu0 %59
    %v61 = vmul.f32 %v57, 0.032258064
    %v62 = vmul.f32 %v60, 0.032258064
    %v63 = vrsqrt.pop %v61
    %v64 = vmul.f32 %v63, %v61
    %v65 = vmul.f32 %v64, %v63
    %v66 = vmul.f32 0.5, %v65
    %v67 = vsub.f32 1.5, %v66
    %v68 = vmul.f32 %v63, %v67
    %v69 = vmul.f32 %v61, %v68
    %vm70 = vcmp.eq.f32.partialorder %v61, inf
    %v71 = vsel %vm70, %v61, %v69
    %vm72 = vcmp.eq.f32.partialorder %v61, 0.0
    %v73 = vand.u32 %v61, 2147483648
    %v74 = vsel %vm72, %v73, %v71
    %v75 = vrsqrt.pop %v62
    %v76 = vmul.f32 %v75, %v62
    %v77 = vmul.f32 %v76, %v75
    %v78 = vmul.f32 0.5, %v77
    %v79 = vsub.f32 1.5, %v78
    %v80 = vmul.f32 %v75, %v79
    %v81 = vmul.f32 %v62, %v80
    %vm82 = vcmp.eq.f32.partialorder %v62, inf
    %v83 = vsel %vm82, %v62, %v81
    %vm84 = vcmp.eq.f32.partialorder %v62, 0.0
    %v85 = vand.u32 %v62, 2147483648
    %v86 = vsel %vm84, %v85, %v83
    %s87 = sld [smem:[#allocation2]]
    %v88 = vadd.f32 %v74, 1e-06
    %v89 = vadd.f32 %v86, 1e-06
    %v90 = vrcp.pop %v88
    %v91 = vmul.f32 %v88, %v90
    %v92 = vsub.f32 1.0, %v91
    %v93 = vmul.f32 %v90, %v92
    %v94 = vadd.f32 %v90, %v93
    %vm95 = vweird.f32 %v88
    %vm96 = vweird.f32 %v90
    %vm97 = vmor %vm95, %vm96
    %v98 = vsel %vm97, %v90, %v94
    %v99 = vand.u32 2147483647, %v88
    %vm100 = vcmp.eq.f32.partialorder %v99, 8.507059e+37
    %v101 = vand.u32 %v88, 2147483648
    %v102 = vor.u32 1.1754944e-38, %v101
    %v103 = vsel %vm100, %v102, %v98
    %v104 = vrcp.pop %v89
    %v105 = vmul.f32 %v89, %v104
    %v106 = vsub.f32 1.0, %v105
    %v107 = vmul.f32 %v104, %v106
    %v108 = vadd.f32 %v104, %v107
    %vm109 = vweird.f32 %v89
    %vm110 = vweird.f32 %v104
    %vm111 = vmor %vm109, %vm110
    %v112 = vsel %vm111, %v104, %v108
    %v113 = vand.u32 2147483647, %v89
    %vm114 = vcmp.eq.f32.partialorder %v113, 8.507059e+37
    %v115 = vand.u32 %v89, 2147483648
    %v116 = vor.u32 1.1754944e-38, %v115
    %v117 = vsel %vm114, %v116, %v112
    %v118 = vstv %s87
    %v119 = vmul.f32 %v118, %v103
    %v120 = vmul.f32 %v118, %v117
    %v121 = vmul.f32 %v51, %v119
    %v122 = vmul.f32 %v52, %v120
    %s123 = sld [smem:[#allocation3]]
    %v124 = vstv %s123
    %v125 = vadd.f32 %v121, %v124
    %v126 = vadd.f32 %v122, %v124
    %127 = vst.msk [vmem:[#allocation7] sm:$0xff] %vm35, %v125
    %128 = vst.msk [vmem:[#allocation7 + $0x8] sm:$0xff] %vm35, %v126
    // Predicated region
    $region18: #{tpu_custom_call.1} parent=1 // pred_check
      _
    $region19: #{tpu_custom_call.1} parent=1 // pred_check_branch
      %130 = sbr.rel (0) target = $region21
    $region20: #{tpu_custom_call.1} parent=1 // pred_region
      %132 = vsyncadd [#allocation6], 0
      %s133 = sshll.u32 [#allocation7], 4
      %s134 = int_to_ptr.vmem [resolvable:$true] %s133
      %s135 = sshll.u32 %s3, 4
      %s136 = int_to_ptr.hbm [resolvable:$true] %s135
      %141 = dma.vmem_to_hbm [thread:$0]  %s134, 256, %s136, [#allocation6], 128, 128, 8
    $region21: #{tpu_custom_call.1} parent=1 // pred_fallthru
      _
    // Predicated region
    $region22: #{tpu_custom_call.1} parent=1 // pred_check
      _
    $region23: #{tpu_custom_call.1} parent=1 // pred_check_branch
      %143 = sbr.rel (0) target = $region25
    $region24: #{tpu_custom_call.1} parent=1 // pred_region
      %145 = dma.done [#allocation6], 256
    $region25: #{tpu_custom_call.1} parent=1 // pred_fallthru
      _
    %146 = vsyncpa [#allocation5], 1
    %147 = vsyncpa [#allocation6], 1

</llo_original>
